<compile_context>
chip_gen: v6e
topology: v6e:2x2x1
jax: 0.10.0
libtpu: 0.0.40
codegen_flags: <defaults>
</compile_context>

<pallas_src>
import jax
import jax.numpy as jnp
import numpy as np
from jax import lax
from jax.experimental import pallas as pl
from jax.experimental.pallas import tpu as pltpu


# Packed weight slab layout ((128, 128) bf16, sublane-aligned rows):
#   rows   0:4   cols 0:64 -> conv1 effective weight  (4 in-pixels, 4 pix x 16 ch)
#   rows   8:24  cols 0:32 -> conv2 center-tap weight (16, 32)
#   rows  24:56  cols 0:64 -> fc1 weight^T            (32, 64)
#   rows  56:120 cols 0:4  -> fc2 weight^T            (64, 4)
# Bias slab ((8, 128) f32):
#   row 0 cols 0:16 -> conv1 bias ; row 1 cols 0:32 -> conv2 bias
#   row 2 cols 0:64 -> fc1 bias   ; row 3 cols 0:4  -> fc2 bias


def cnn_kernel(x_ref, w_ref, b_ref, out_ref):
    """Fused conv1+relu+maxpool -> conv2+relu -> fc1+relu -> fc2 for one batch tile.

    x_ref:   (tile, 4)    the 4 input pixels per sample (f32)
    w_ref:   (128, 128)   packed weights (bf16, see layout above)
    b_ref:   (8, 128)     packed biases (f32)
    out_ref: (tile, 4)    fc2 output
    """
    x = x_ref[...].astype(jnp.bfloat16)                              # in-vreg cast

    # conv1 as a single matmul: columns are [pix0 ch0..15 | pix1 | pix2 | pix3].
    h1 = jnp.dot(x, w_ref[0:4, 0:64],
                 preferred_element_type=jnp.float32)                 # (tile, 64) f32

    # Fused 2x2 maxpool over the 4 pixel blocks; bias + ReLU hoisted out of the
    # max (max_i relu(h_i + b) == relu(max_i h_i + b)) -- exact.
    m = jnp.maximum(jnp.maximum(h1[:, 0:16], h1[:, 16:32]),
                    jnp.maximum(h1[:, 32:48], h1[:, 48:64]))         # (tile, 16)
    pooled = jnp.maximum(m + b_ref[0:1, 0:16], 0.0)

    # conv2: 3x3 pad-1 conv on a 1x1 map -> exactly its (16, 32) center tap.
    h2 = jnp.maximum(
        jnp.dot(pooled.astype(jnp.bfloat16), w_ref[8:24, 0:32],
                preferred_element_type=jnp.float32) + b_ref[1:2, 0:32],
        0.0)                                                          # (tile, 32)

    # fc1 + relu
    h3 = jnp.maximum(
        jnp.dot(h2.astype(jnp.bfloat16), w_ref[24:56, 0:64],
                preferred_element_type=jnp.float32) + b_ref[2:3, 0:64],
        0.0)                                                          # (tile, 64)

    # fc2: narrow (64, 4) weight; output block is (tile, 4) -> minimal HBM writeback.
    out_ref[...] = (jnp.dot(h3.astype(jnp.bfloat16), w_ref[56:120, 0:4],
                            preferred_element_type=jnp.float32)
                    + b_ref[3:4, 0:4])


def _pack_params(params):
    """Fold conv1/conv2 and pack weights (bf16) + biases (f32) into two slabs.

    Tiny trace-time ops (<=64 KiB), independent of batch size; in deployment
    this would be done once offline.
    """
    w1, b1, w2, b2, wfc1, bfc1, wfc2, bfc2 = params

    # conv1 (3x3, pad 1) on a 2x2 map == linear map from 4 input pixels to
    # 4 output pixels x 16 channels.  sel[p, q, kh, kw] = 1 iff kernel tap
    # (kh, kw) of output pixel q reads input pixel p.
    sel = np.zeros((4, 4, 3, 3), np.float32)
    for p in range(4):
        ih, iw = divmod(p, 2)
        for q in range(4):
            oh, ow = divmod(q, 2)
            kh, kw = ih + 1 - oh, iw + 1 - ow
            if 0 <= kh < 3 and 0 <= kw < 3:
                sel[p, q, kh, kw] = 1.0
    w1_eff = jnp.einsum('pqhw,chw->pqc', jnp.asarray(sel),
                        w1[:, 0].astype(jnp.float32)).reshape(4, 64)  # (4, 64)

    w2c = w2[:, :, 1, 1].T                      # (16, 32) center tap of conv2
    w3t = wfc1.T                                # (32, 64)
    w4t = wfc2.T                                # (64, 4)

    wslab = jnp.zeros((128, 128), jnp.bfloat16)
    wslab = wslab.at[0:4, 0:64].set(w1_eff.astype(jnp.bfloat16))
    wslab = wslab.at[8:24, 0:32].set(w2c.astype(jnp.bfloat16))
    wslab = wslab.at[24:56, 0:64].set(w3t.astype(jnp.bfloat16))
    wslab = wslab.at[56:120, 0:4].set(w4t.astype(jnp.bfloat16))

    bslab = jnp.zeros((8, 128), jnp.float32)
    bslab = bslab.at[0, 0:16].set(b1.astype(jnp.float32))
    bslab = bslab.at[1, 0:32].set(b2.astype(jnp.float32))
    bslab = bslab.at[2, 0:64].set(bfc1.astype(jnp.float32))
    bslab = bslab.at[3, 0:4].set(bfc2.astype(jnp.float32))
    return wslab, bslab


def _choose_tile(N, block_rows):
    """Batch-tile size.

    Small batches: one step (tile == N is always legal, even if N % 8 != 0).
    Mid/large batches: at least 2 grid steps (8-aligned) so dimension_semantics
    ("parallel",) can shard across both v7x TensorCores, capped at block_rows
    so the lane-padded pipeline buffers + intermediates stay well under the
    32 MiB scoped VMEM limit on every generation.
    """
    if N <= max(8, block_rows // 8):
        return N
    half = pl.cdiv(N, 2)
    return min(block_rows, ((half + 7) // 8) * 8)


def cnn_forward(x, params, *, block_rows=4096):
    """x: (N, 1, 2, 2) float32 NCHW.  Returns (N, 4) float32."""
    N = x.shape[0]
    x_flat = x.reshape(N, 4).astype(jnp.float32)   # pixel order: (0,0),(0,1),(1,0),(1,1)
    wslab, bslab = _pack_params(params)

    tile = _choose_tile(N, block_rows)
    grid = (pl.cdiv(N, tile),)

    return pl.pallas_call(
        cnn_kernel,
        out_shape=jax.ShapeDtypeStruct((N, 4), jnp.float32),
        grid=grid,
        in_specs=[
            pl.BlockSpec((tile, 4), lambda i: (i, 0)),      # activations: tiled over batch
            pl.BlockSpec((128, 128), lambda i: (0, 0)),     # weights: VMEM-resident
            pl.BlockSpec((8, 128), lambda i: (0, 0)),       # biases:  VMEM-resident
        ],
        out_specs=pl.BlockSpec((tile, 4), lambda i: (i, 0)),
        compiler_params=pltpu.CompilerParams(
            dimension_semantics=("parallel",),              # megacore-shardable
            vmem_limit_bytes=32 * 1024 * 1024),             # v5e default is 16 MiB
    )(x_flat, wslab, bslab)


def cnn_reference(x, params):
    """Pure-JAX f32 reference mirroring the PyTorch forward exactly."""
    w1, b1, w2, b2, wfc1, bfc1, wfc2, bfc2 = params
    dn1 = lax.conv_dimension_numbers(x.shape, w1.shape, ('NCHW', 'OIHW', 'NCHW'))
    h = lax.conv_general_dilated(x, w1, (1, 1), ((1, 1), (1, 1)),
                                 dimension_numbers=dn1)
    h = jax.nn.relu(h + b1.reshape(1, 16, 1, 1))
    h = jnp.max(h, axis=(2, 3), keepdims=True)                  # maxpool 2x2 on 2x2
    dn2 = lax.conv_dimension_numbers(h.shape, w2.shape, ('NCHW', 'OIHW', 'NCHW'))
    h = lax.conv_general_dilated(h, w2, (1, 1), ((1, 1), (1, 1)),
                                 dimension_numbers=dn2)
    h = jax.nn.relu(h + b2.reshape(1, 32, 1, 1))
    h = h.reshape(-1, 32)
    h = jax.nn.relu(h @ wfc1.T + bfc1)
    return (h @ wfc2.T + bfc2).reshape(-1, 4)


def init_params(key):
    """Deterministic synthetic parameters (shapes match the PyTorch module)."""
    ks = jax.random.split(key, 8)
    w1 = jax.random.normal(ks[0], (16, 1, 3, 3), jnp.float32) * 0.2    # conv1.weight
    b1 = jax.random.normal(ks[1], (16,), jnp.float32) * 0.1            # conv1.bias
    w2 = jax.random.normal(ks[2], (32, 16, 3, 3), jnp.float32) * 0.1   # conv2.weight
    b2 = jax.random.normal(ks[3], (32,), jnp.float32) * 0.1            # conv2.bias
    wfc1 = jax.random.normal(ks[4], (64, 32), jnp.float32) * 0.1       # fc1.weight
    bfc1 = jax.random.normal(ks[5], (64,), jnp.float32) * 0.1          # fc1.bias
    wfc2 = jax.random.normal(ks[6], (4, 64), jnp.float32) * 0.1        # fc2.weight
    bfc2 = jax.random.normal(ks[7], (4,), jnp.float32) * 0.1           # fc2.bias
    return (w1, b1, w2, b2, wfc1, bfc1, wfc2, bfc2)


if __name__ == "__main__":
    key = jax.random.PRNGKey(0)
    pkey, xkey1, xkey2 = jax.random.split(key, 3)
    params = init_params(pkey)

    # bf16 matmul operands with f32 accumulation + f32 biases vs f32 reference.
    RTOL = ATOL = 3e-2

    # Test 1: small batch (single grid step).
    N1 = 64
    x1 = jax.random.normal(xkey1, (N1, 1, 2, 2), jnp.float32)   # NCHW, like PyTorch
    out1 = jax.block_until_ready(cnn_forward(x1, params))
    ref1 = jax.block_until_ready(cnn_reference(x1, params))
    assert out1.shape == (N1, 4) and out1.dtype == jnp.float32
    np.testing.assert_allclose(np.asarray(out1), np.asarray(ref1),
                               rtol=RTOL, atol=ATOL)

    # Test 2: multi-step grid with a ragged tail (N not a multiple of the tile
    # and the tail not a multiple of 8) -- exercises edge-block masking.
    N2 = 603
    x2 = jax.random.normal(xkey2, (N2, 1, 2, 2), jnp.float32)
    out2 = jax.block_until_ready(cnn_forward(x2, params, block_rows=4096))
    ref2 = jax.block_until_ready(cnn_reference(x2, params))
    assert out2.shape == (N2, 4) and out2.dtype == jnp.float32
    np.testing.assert_allclose(np.asarray(out2), np.asarray(ref2),
                               rtol=RTOL, atol=ATOL)

    print("KERNEL_OK")
</pallas_src>

<mosaic_0001>
module attributes {stable_mosaic.version = 11 : i64} {
  func.func @cnn_kernel(%arg0: i32, %arg1: memref<64x4xf32, #tpu.memory_space<vmem>>, %arg2: memref<128x128xbf16, #tpu.memory_space<vmem>>, %arg3: memref<8x128xf32, #tpu.memory_space<vmem>>, %arg4: memref<64x4xf32, #tpu.memory_space<vmem>>) attributes {dimension_semantics = [#tpu.dimension_semantics<parallel>], iteration_bounds = array<i64: 1>, scalar_prefetch = 0 : i64, scratch_operands = 0 : i64, tpu.core_type = #tpu.core_type<tc>, window_params = [{transform_indices = @transform_0, window_bounds = array<i64: 64, 4>}, {pipeline_mode = #tpu.pipeline_mode<synchronous>, transform_indices = @transform_1, window_bounds = array<i64: 128, 128>}, {pipeline_mode = #tpu.pipeline_mode<synchronous>, transform_indices = @transform_2, window_bounds = array<i64: 8, 128>}, {transform_indices = @transform_3, window_bounds = array<i64: 64, 4>}]} {
    %c0 = arith.constant 0 : index
    %c0_0 = arith.constant 0 : index
    %0 = vector.load %arg1[%c0, %c0_0] : memref<64x4xf32, #tpu.memory_space<vmem>>, vector<64x4xf32>
    %1 = arith.truncf %0 : vector<64x4xf32> to vector<64x4xbf16>
    %c0_1 = arith.constant 0 : index
    %c0_2 = arith.constant 0 : index
    %2 = vector.load %arg2[%c0_1, %c0_2] : memref<128x128xbf16, #tpu.memory_space<vmem>>, vector<4x64xbf16>
    %cst = arith.constant dense<0.000000e+00> : vector<64x64xf32>
    %3 = tpu.matmul %1, %2, %cst {dimension_numbers = #tpu.dot_dimension_numbers<[1], [0], [0], [1], [0, 0, 1, 1], [], []>} : vector<64x4xbf16>, vector<4x64xbf16>, vector<64x64xf32> -> vector<64x64xf32>
    %4 = vector.extract_strided_slice %3 {offsets = [0, 0], sizes = [64, 16], strides = [1, 1]} : vector<64x64xf32> to vector<64x16xf32>
    %5 = vector.extract_strided_slice %3 {offsets = [0, 16], sizes = [64, 16], strides = [1, 1]} : vector<64x64xf32> to vector<64x16xf32>
    %6 = arith.maximumf %4, %5 : vector<64x16xf32>
    %7 = vector.extract_strided_slice %3 {offsets = [0, 32], sizes = [64, 16], strides = [1, 1]} : vector<64x64xf32> to vector<64x16xf32>
    %8 = vector.extract_strided_slice %3 {offsets = [0, 48], sizes = [64, 16], strides = [1, 1]} : vector<64x64xf32> to vector<64x16xf32>
    %9 = arith.maximumf %7, %8 : vector<64x16xf32>
    %10 = arith.maximumf %6, %9 : vector<64x16xf32>
    %c0_3 = arith.constant 0 : index
    %c0_4 = arith.constant 0 : index
    %11 = vector.load %arg3[%c0_3, %c0_4] : memref<8x128xf32, #tpu.memory_space<vmem>>, vector<1x16xf32>
    %12 = vector.broadcast %11 : vector<1x16xf32> to vector<64x16xf32>
    %13 = arith.addf %10, %12 : vector<64x16xf32>
    %cst_5 = arith.constant 0.000000e+00 : f32
    %14 = vector.broadcast %cst_5 : f32 to vector<64x16xf32>
    %15 = arith.maximumf %13, %14 : vector<64x16xf32>
    %16 = arith.truncf %15 : vector<64x16xf32> to vector<64x16xbf16>
    %c8 = arith.constant 8 : index
    %c0_6 = arith.constant 0 : index
    %17 = vector.load %arg2[%c8, %c0_6] : memref<128x128xbf16, #tpu.memory_space<vmem>>, vector<16x32xbf16>
    %cst_7 = arith.constant dense<0.000000e+00> : vector<64x32xf32>
    %18 = tpu.matmul %16, %17, %cst_7 {dimension_numbers = #tpu.dot_dimension_numbers<[1], [0], [0], [1], [0, 0, 1, 1], [], []>} : vector<64x16xbf16>, vector<16x32xbf16>, vector<64x32xf32> -> vector<64x32xf32>
    %c1 = arith.constant 1 : index
    %c0_8 = arith.constant 0 : index
    %19 = vector.load %arg3[%c1, %c0_8] : memref<8x128xf32, #tpu.memory_space<vmem>>, vector<1x32xf32>
    %20 = vector.broadcast %19 : vector<1x32xf32> to vector<64x32xf32>
    %21 = arith.addf %18, %20 : vector<64x32xf32>
    %cst_9 = arith.constant 0.000000e+00 : f32
    %22 = vector.broadcast %cst_9 : f32 to vector<64x32xf32>
    %23 = arith.maximumf %21, %22 : vector<64x32xf32>
    %24 = arith.truncf %23 : vector<64x32xf32> to vector<64x32xbf16>
    %c24 = arith.constant 24 : index
    %c0_10 = arith.constant 0 : index
    %25 = vector.load %arg2[%c24, %c0_10] : memref<128x128xbf16, #tpu.memory_space<vmem>>, vector<32x64xbf16>
    %cst_11 = arith.constant dense<0.000000e+00> : vector<64x64xf32>
    %26 = tpu.matmul %24, %25, %cst_11 {dimension_numbers = #tpu.dot_dimension_numbers<[1], [0], [0], [1], [0, 0, 1, 1], [], []>} : vector<64x32xbf16>, vector<32x64xbf16>, vector<64x64xf32> -> vector<64x64xf32>
    %c2 = arith.constant 2 : index
    %c0_12 = arith.constant 0 : index
    %27 = vector.load %arg3[%c2, %c0_12] : memref<8x128xf32, #tpu.memory_space<vmem>>, vector<1x64xf32>
    %28 = vector.broadcast %27 : vector<1x64xf32> to vector<64x64xf32>
    %29 = arith.addf %26, %28 : vector<64x64xf32>
    %cst_13 = arith.constant 0.000000e+00 : f32
    %30 = vector.broadcast %cst_13 : f32 to vector<64x64xf32>
    %31 = arith.maximumf %29, %30 : vector<64x64xf32>
    %32 = arith.truncf %31 : vector<64x64xf32> to vector<64x64xbf16>
    %c56 = arith.constant 56 : index
    %c0_14 = arith.constant 0 : index
    %33 = vector.load %arg2[%c56, %c0_14] : memref<128x128xbf16, #tpu.memory_space<vmem>>, vector<64x4xbf16>
    %cst_15 = arith.constant dense<0.000000e+00> : vector<64x4xf32>
    %34 = tpu.matmul %32, %33, %cst_15 {dimension_numbers = #tpu.dot_dimension_numbers<[1], [0], [0], [1], [0, 0, 1, 1], [], []>} : vector<64x64xbf16>, vector<64x4xbf16>, vector<64x4xf32> -> vector<64x4xf32>
    %c3 = arith.constant 3 : index
    %c0_16 = arith.constant 0 : index
    %35 = vector.load %arg3[%c3, %c0_16] : memref<8x128xf32, #tpu.memory_space<vmem>>, vector<1x4xf32>
    %36 = vector.broadcast %35 : vector<1x4xf32> to vector<64x4xf32>
    %37 = arith.addf %34, %36 : vector<64x4xf32>
    %c0_17 = arith.constant 0 : index
    %c0_18 = arith.constant 0 : index
    %38 = vector.load %arg4[%c0_17, %c0_18] : memref<64x4xf32, #tpu.memory_space<vmem>>, vector<64x4xf32>
    tpu.vector_store %arg4[%c0_17, %c0_18], %37 {strides = array<i32>} : memref<64x4xf32, #tpu.memory_space<vmem>>, vector<64x4xf32>,
    return
  }
  func.func @transform_0(%arg0: i32) -> (i32, i32) {
    %c0_i32 = arith.constant 0 : i32
    %c0_i32_0 = arith.constant 0 : i32
    return %arg0, %c0_i32 : i32, i32
  }
  func.func @transform_1(%arg0: i32) -> (i32, i32) {
    %c0_i32 = arith.constant 0 : i32
    %c0_i32_0 = arith.constant 0 : i32
    %c0_i32_1 = arith.constant 0 : i32
    return %c0_i32, %c0_i32_0 : i32, i32
  }
  func.func @transform_2(%arg0: i32) -> (i32, i32) {
    %c0_i32 = arith.constant 0 : i32
    %c0_i32_0 = arith.constant 0 : i32
    %c0_i32_1 = arith.constant 0 : i32
    return %c0_i32, %c0_i32_0 : i32, i32
  }
  func.func @transform_3(%arg0: i32) -> (i32, i32) {
    %c0_i32 = arith.constant 0 : i32
    %c0_i32_0 = arith.constant 0 : i32
    return %arg0, %c0_i32 : i32, i32
  }
}

</mosaic_0001>

<llo_original>
// kernel: tpu_custom_call.1
$region0: #{tpu_custom_call.1}
  #allocation0 [shape = 'u32[]', space=smem, size = 0x4, offset = 0x4, fixed_abs, tag = 'smem constant byte address 0x4 - core index']
  #allocation1 [shape = 'u32[144,128]{1,0:T(1,128)}', space=vmem, size = 0x12000, scoped, tag = 'internal scratch']
  %s0 = inlined_call_operand.vmem [shape: f32[64,4], index: 0, kind: input, shape index: {}]
  %s1 = inlined_call_operand.vmem [shape: bf16[128,128], index: 1, kind: input, shape index: {}]
  %s2 = inlined_call_operand.hbm [shape: f32[8,128], index: 2, kind: input, shape index: {}]
  %s3 = inlined_call_operand.vmem [shape: f32[64,4], index: 3, kind: output, shape index: {}]
  %s4 = sld [smem:[#allocation0]]
  $region26: #{tpu_custom_call.1} parent=0
    _
  %s6 = ssub.s32 1, %s4
  %s7 = scalar_select 0, %s6, %s4
  $region1: #{tpu_custom_call.1} parent=0
    #allocation2 [shape = 'u8[4096]{0}', space=vmem, size = 0x1000, scoped, tag = 'input window, operand 2, single buffered']
    #allocation3 [shape = 's32[1]{0}', space=sflag, size = 0x4, scoped, tag = 'scoped memory for tpu_custom_call.1']
    %8 = vsyncpa [#allocation3], 0
    // Predicated region
    $region2: #{tpu_custom_call.1} parent=1 // pred_check
      _
    $region3: #{tpu_custom_call.1} parent=1 // pred_check_branch
      %10 = sbr.rel (0) target = $region5
    $region4: #{tpu_custom_call.1} parent=1 // pred_region
      _
    $region5: #{tpu_custom_call.1} parent=1 // pred_fallthru
      _
    // Predicated region
    $region6: #{tpu_custom_call.1} parent=1 // pred_check
      _
    $region7: #{tpu_custom_call.1} parent=1 // pred_check_branch
      %12 = sbr.rel (0) target = $region9
    $region8: #{tpu_custom_call.1} parent=1 // pred_region
      _
    $region9: #{tpu_custom_call.1} parent=1 // pred_fallthru
      _
    // Predicated region
    $region10: #{tpu_custom_call.1} parent=1 // pred_check
      _
    $region11: #{tpu_custom_call.1} parent=1 // pred_check_branch
      %14 = sbr.rel (0) target = $region13
    $region12: #{tpu_custom_call.1} parent=1 // pred_region
      %s16 = ssub.s32 128, 128
      %17 = vsyncadd [#allocation3], %s16
      %s19 = sshll.u32 [#allocation2], 4
      %s20 = int_to_ptr.vmem [resolvable:$true] %s19
      %22 = dma.hbm_to_vmem [thread:$0]  %s2, 128, %s20, [#allocation3]
    $region13: #{tpu_custom_call.1} parent=1 // pred_fallthru
      _
    // Predicated region
    $region14: #{tpu_custom_call.1} parent=1 // pred_check
      _
    $region15: #{tpu_custom_call.1} parent=1 // pred_check_branch
      %24 = sbr.rel (0) target = $region17
    $region16: #{tpu_custom_call.1} parent=1 // pred_region
      %25 = dma.done [#allocation3], 128
    $region17: #{tpu_custom_call.1} parent=1 // pred_fallthru
      _
    %v27 = vld [vmem:[%s0] sm:$0xff]
    %v28 = vld [vmem:[%s0 + $0x8] sm:$0xff]
    %v29 = vld [vmem:[%s0 + $0x10] sm:$0xff]
    %v30 = vld [vmem:[%s0 + $0x18] sm:$0xff]
    %v31 = vld [vmem:[%s0 + $0x20] sm:$0xff]
    %v32 = vld [vmem:[%s0 + $0x28] sm:$0xff]
    %v33 = vld [vmem:[%s0 + $0x30] sm:$0xff]
    %v34 = vld [vmem:[%s0 + $0x38] sm:$0xff]
    %v35 = vpack.c.bf16 %v28, %v27
    %v36 = vpack.c.bf16 %v30, %v29
    %v37 = vpack.c.bf16 %v32, %v31
    %v38 = vpack.c.bf16 %v34, %v33
    %v39 = vld [vmem:[%s1] sm:$0x3]
    %vm40 = vcmask 31744
    %v42 = vsel %vm40, %v35, 0
    %v45 = vsel %vm40, %v36, 0
    %v48 = vsel %vm40, %v37, 0
    %v51 = vsel %vm40, %v38, 0
    %vm53 = vcmask 1041408
    %v55 = vsel %vm53, %v39, 0
    %57 = vmatprep.subr.bf16.mxu0 0
    %58 = vmatpush1.bf16.msra.mxu0 0
    %59 = vmatprep.subr.bf16.mxu0 0
    %60 = vmatpush1.bf16.msra.mxu0 0
    %61 = vmatprep.subr.bf16.mxu0 0
    %62 = vmatpush1.bf16.msra.mxu0 0
    %63 = vmatprep.subr.bf16.mxu0 0
    %64 = vmatpush1.bf16.msra.mxu0 0
    %65 = vmatprep.subr.bf16.mxu0 0
    %66 = vmatpush1.bf16.msra.mxu0 0
    %67 = vmatprep.subr.bf16.mxu0 0
    %68 = vmatpush1.bf16.msra.mxu0 0
    %69 = vmatprep.subr.bf16.mxu0 0
    %70 = vmatpush1.bf16.msra.mxu0 0
    %71 = vmatprep.subr.bf16.mxu0 0
    %72 = vmatpush1.bf16.msra.mxu0 %v55
    %73 = vmatprep.subr.bf16.mxu0 0
    %74 = vmatpush2.bf16.msra.mxu0 0
    %75 = vmatprep.subr.bf16.mxu0 0
    %76 = vmatpush2.bf16.msra.mxu0 0
    %77 = vmatprep.subr.bf16.mxu0 0
    %78 = vmatpush2.bf16.msra.mxu0 0
    %79 = vmatprep.subr.bf16.mxu0 0
    %80 = vmatpush2.bf16.msra.mxu0 0
    %81 = vmatprep.subr.bf16.mxu0 0
    %82 = vmatpush2.bf16.msra.mxu0 0
    %83 = vmatprep.subr.bf16.mxu0 0
    %84 = vmatpush2.bf16.msra.mxu0 0
    %85 = vmatprep.subr.bf16.mxu0 0
    %86 = vmatpush2.bf16.msra.mxu0 0
    %87 = vmatprep.subr.bf16.mxu0 0
    %88 = vmatpush2.bf16.msra.mxu0 0
    %89 = vmatprep.mubr.bf16.mxu0 0
    %90 = vmatmul.mubr.bf16.gmra.mxu0 %v42
    %v91 = vpop.f32.mrf.mxu0
    %v92 = vadd.f32 0.0, %v91
    %v93 = vpop.f32.mrf.mxu0
    %v94 = vpop.f32.mrf.mxu0
    %v95 = vadd.f32 0.0, %v94
    %v96 = vpop.f32.mrf.mxu0
    %97 = vmatprep.mubr.bf16.mxu0 0
    %98 = vmatmul.mubr.bf16.gmra.mxu0 %v45
    %v99 = vpop.f32.mrf.mxu0
    %v100 = vadd.f32 0.0, %v99
    %v101 = vpop.f32.mrf.mxu0
    %v102 = vpop.f32.mrf.mxu0
    %v103 = vadd.f32 0.0, %v102
    %v104 = vpop.f32.mrf.mxu0
    %105 = vmatprep.mubr.bf16.mxu0 0
    %106 = vmatmul.mubr.bf16.gmra.mxu0 %v48
    %v107 = vpop.f32.mrf.mxu0
    %v108 = vadd.f32 0.0, %v107
    %v109 = vpop.f32.mrf.mxu0
    %v110 = vpop.f32.mrf.mxu0
    %v111 = vadd.f32 0.0, %v110
    %v112 = vpop.f32.mrf.mxu0
    %113 = vmatprep.mubr.bf16.mxu0 0
    %114 = vmatmul.mubr.bf16.gmra.mxu0 %v51
    %v115 = vpop.f32.mrf.mxu0
    %v116 = vadd.f32 0.0, %v115
    %v117 = vpop.f32.mrf.mxu0
    %v118 = vpop.f32.mrf.mxu0
    %v119 = vadd.f32 0.0, %v118
    %v120 = vpop.f32.mrf.mxu0
    %121 = vdwg.mxu0
    %130 = vrot.lane.b32.xlu0 %v92, 112
    %v131 = vpop.permute.xlu0 %130
    %132 = vrot.lane.b32.xlu0 %v95, 112
    %v133 = vpop.permute.xlu0 %132
    %134 = vrot.lane.b32.xlu0 %v100, 112
    %v135 = vpop.permute.xlu0 %134
    %136 = vrot.lane.b32.xlu0 %v103, 112
    %v137 = vpop.permute.xlu0 %136
    %138 = vrot.lane.b32.xlu0 %v108, 112
    %v139 = vpop.permute.xlu0 %138
    %140 = vrot.lane.b32.xlu0 %v111, 112
    %v141 = vpop.permute.xlu0 %140
    %142 = vrot.lane.b32.xlu0 %v116, 112
    %v143 = vpop.permute.xlu0 %142
    %144 = vrot.lane.b32.xlu0 %v119, 112
    %v145 = vpop.permute.xlu0 %144
    %v154 = vmax.f32 %v92, %v131
    %v155 = vmax.f32 %v95, %v133
    %v156 = vmax.f32 %v100, %v135
    %v157 = vmax.f32 %v103, %v137
    %v158 = vmax.f32 %v108, %v139
    %v159 = vmax.f32 %v111, %v141
    %v160 = vmax.f32 %v116, %v143
    %v161 = vmax.f32 %v119, %v145
    %170 = vrot.lane.b32.xlu0 %v154, 96
    %v171 = vpop.permute.xlu0 %170
    %172 = vrot.lane.b32.xlu0 %v155, 96
    %v173 = vpop.permute.xlu0 %172
    %174 = vrot.lane.b32.xlu0 %v156, 96
    %v175 = vpop.permute.xlu0 %174
    %176 = vrot.lane.b32.xlu0 %v157, 96
    %v177 = vpop.permute.xlu0 %176
    %178 = vrot.lane.b32.xlu0 %v158, 96
    %v179 = vpop.permute.xlu0 %178
    %180 = vrot.lane.b32.xlu0 %v159, 96
    %v181 = vpop.permute.xlu0 %180
    %182 = vrot.lane.b32.xlu0 %v160, 96
    %v183 = vpop.permute.xlu0 %182
    %184 = vrot.lane.b32.xlu0 %v161, 96
    %v185 = vpop.permute.xlu0 %184
    %v194 = vmax.f32 %v154, %v171
    %v195 = vmax.f32 %v155, %v173
    %v196 = vmax.f32 %v156, %v175
    %v197 = vmax.f32 %v157, %v177
    %v198 = vmax.f32 %v158, %v179
    %v199 = vmax.f32 %v159, %v181
    %v200 = vmax.f32 %v160, %v183
    %v201 = vmax.f32 %v161, %v185
    %v202 = vld [vmem:[#allocation2] sm:$0x1]
    %v203 = vlaneseq
    %v204 = vshrl.u32 %v203, 7
    %v205 = vsub.s32 0, %v204
    %v206 = vrot.slane %v202, %v205
    %v207 = vadd.f32 %v194, %v206
    %v208 = vadd.f32 %v195, %v206
    %v209 = vadd.f32 %v196, %v206
    %v210 = vadd.f32 %v197, %v206
    %v211 = vadd.f32 %v198, %v206
    %v212 = vadd.f32 %v199, %v206
    %v213 = vadd.f32 %v200, %v206
    %v214 = vadd.f32 %v201, %v206
    %v215 = vmax.f32 %v207, 0.0
    %v216 = vmax.f32 %v208, 0.0
    %v217 = vmax.f32 %v209, 0.0
    %v218 = vmax.f32 %v210, 0.0
    %v219 = vmax.f32 %v211, 0.0
    %v220 = vmax.f32 %v212, 0.0
    %v221 = vmax.f32 %v213, 0.0
    %v222 = vmax.f32 %v214, 0.0
    %v223 = vpack.c.bf16 %v216, %v215
    %v224 = vpack.c.bf16 %v218, %v217
    %v225 = vpack.c.bf16 %v220, %v219
    %v226 = vpack.c.bf16 %v222, %v221
    %v227 = vld [vmem:[%s1 + $0x4] sm:$0xf]
    %v228 = vld [vmem:[%s1 + $0x8] sm:$0xf]
    %v229 = vld [vmem:[#allocation2 + $0x1] sm:$0x1]
    %v230 = vlaneseq
    %v231 = vshrl.u32 %v230, 7
    %v232 = vsub.s32 0, %v231
    %v233 = vrot.slane %v229, %v232
    %v236 = vunpack.c.l.b16 %v227
    %v237 = vunpack.c.l.b16 %v228
    %v238 = vpack.c.b16 %v237, %v236
    %vm240 = vcmask 130048
    %v242 = vsel %vm240, %v223, 0
    %v245 = vsel %vm240, %v224, 0
    %v248 = vsel %vm240, %v225, 0
    %v251 = vsel %vm240, %v226, 0
    %253 = vmatprep.subr.bf16.mxu0 0
    %254 = vmatpush1.bf16.msra.mxu0 0
    %255 = vmatprep.subr.bf16.mxu0 0
    %256 = vmatpush1.bf16.msra.mxu0 0
    %257 = vmatprep.subr.bf16.mxu0 0
    %258 = vmatpush1.bf16.msra.mxu0 0
    %259 = vmatprep.subr.bf16.mxu0 0
    %260 = vmatpush1.bf16.msra.mxu0 0
    %261 = vmatprep.subr.bf16.mxu0 0
    %262 = vmatpush1.bf16.msra.mxu0 0
    %263 = vmatprep.subr.bf16.mxu0 0
    %264 = vmatpush1.bf16.msra.mxu0 0
    %265 = vmatprep.subr.bf16.mxu0 0
    %266 = vmatpush1.bf16.msra.mxu0 0
    %267 = vmatprep.subr.bf16.mxu0 0
    %268 = vmatpush1.bf16.msra.mxu0 %v238
    %269 = vmatprep.subr.bf16.mxu0 0
    %270 = vmatpush2.bf16.msra.mxu0 0
    %271 = vmatprep.subr.bf16.mxu0 0
    %272 = vmatpush2.bf16.msra.mxu0 0
    %273 = vmatprep.subr.bf16.mxu0 0
    %274 = vmatpush2.bf16.msra.mxu0 0
    %275 = vmatprep.subr.bf16.mxu0 0
    %276 = vmatpush2.bf16.msra.mxu0 0
    %277 = vmatprep.subr.bf16.mxu0 0
    %278 = vmatpush2.bf16.msra.mxu0 0
    %279 = vmatprep.subr.bf16.mxu0 0
    %280 = vmatpush2.bf16.msra.mxu0 0
    %281 = vmatprep.subr.bf16.mxu0 0
    %282 = vmatpush2.bf16.msra.mxu0 0
    %283 = vmatprep.subr.bf16.mxu0 0
    %284 = vmatpush2.bf16.msra.mxu0 0
    %285 = vmatprep.mubr.bf16.mxu0 0
    %286 = vmatmul.mubr.bf16.gmra.mxu0 %v242
    %v287 = vpop.f32.mrf.mxu0
    %v288 = vadd.f32 %v233, %v287
    %v289 = vpop.f32.mrf.mxu0
    %v290 = vpop.f32.mrf.mxu0
    %v291 = vadd.f32 %v233, %v290
    %v292 = vpop.f32.mrf.mxu0
    %293 = vmatprep.mubr.bf16.mxu0 0
    %294 = vmatmul.mubr.bf16.gmra.mxu0 %v245
    %v295 = vpop.f32.mrf.mxu0
    %v296 = vadd.f32 %v233, %v295
    %v297 = vpop.f32.mrf.mxu0
    %v298 = vpop.f32.mrf.mxu0
    %v299 = vadd.f32 %v233, %v298
    %v300 = vpop.f32.mrf.mxu0
    %301 = vmatprep.mubr.bf16.mxu0 0
    %302 = vmatmul.mubr.bf16.gmra.mxu0 %v248
    %v303 = vpop.f32.mrf.mxu0
    %v304 = vadd.f32 %v233, %v303
    %v305 = vpop.f32.mrf.mxu0
    %v306 = vpop.f32.mrf.mxu0
    %v307 = vadd.f32 %v233, %v306
    %v308 = vpop.f32.mrf.mxu0
    %309 = vmatprep.mubr.bf16.mxu0 0
    %310 = vmatmul.mubr.bf16.gmra.mxu0 %v251
    %v311 = vpop.f32.mrf.mxu0
    %v312 = vadd.f32 %v233, %v311
    %v313 = vpop.f32.mrf.mxu0
    %v314 = vpop.f32.mrf.mxu0
    %v315 = vadd.f32 %v233, %v314
    %v316 = vpop.f32.mrf.mxu0
    %317 = vdwg.mxu0
    %v318 = vmax.f32 %v288, 0.0
    %v319 = vmax.f32 %v291, 0.0
    %v320 = vmax.f32 %v296, 0.0
    %v321 = vmax.f32 %v299, 0.0
    %v322 = vmax.f32 %v304, 0.0
    %v323 = vmax.f32 %v307, 0.0
    %v324 = vmax.f32 %v312, 0.0
    %v325 = vmax.f32 %v315, 0.0
    %v326 = vpack.c.bf16 %v319, %v318
    %v327 = vpack.c.bf16 %v321, %v320
    %v328 = vpack.c.bf16 %v323, %v322
    %v329 = vpack.c.bf16 %v325, %v324
    %v330 = vld [vmem:[%s1 + $0xc] sm:$0xf]
    %v331 = vld [vmem:[%s1 + $0x10] sm:$0xf]
    %v332 = vld [vmem:[%s1 + $0x14] sm:$0xf]
    %v333 = vld [vmem:[%s1 + $0x18] sm:$0xf]
    %v334 = vld [vmem:[#allocation2 + $0x2] sm:$0x1]
    %v335 = vlaneseq
    %v336 = vshrl.u32 %v335, 7
    %v337 = vsub.s32 0, %v336
    %v338 = vrot.slane %v334, %v337
    %v343 = vunpack.c.l.b16 %v330
    %v344 = vunpack.c.l.b16 %v331
    %v345 = vunpack.c.l.b16 %v332
    %v346 = vunpack.c.l.b16 %v333
    %v347 = vpack.c.b16 %v344, %v343
    %v348 = vpack.c.b16 %v346, %v345
    %vm351 = vcmask 261120
    %v353 = vsel %vm351, %v326, 0
    %v356 = vsel %vm351, %v327, 0
    %v359 = vsel %vm351, %v328, 0
    %v362 = vsel %vm351, %v329, 0
    %364 = vmatprep.subr.bf16.mxu0 0
    %365 = vmatpush1.bf16.msra.mxu0 0
    %366 = vmatprep.subr.bf16.mxu0 0
    %367 = vmatpush1.bf16.msra.mxu0 0
    %368 = vmatprep.subr.bf16.mxu0 0
    %369 = vmatpush1.bf16.msra.mxu0 0
    %370 = vmatprep.subr.bf16.mxu0 0
    %371 = vmatpush1.bf16.msra.mxu0 0
    %372 = vmatprep.subr.bf16.mxu0 0
    %373 = vmatpush1.bf16.msra.mxu0 0
    %374 = vmatprep.subr.bf16.mxu0 0
    %375 = vmatpush1.bf16.msra.mxu0 0
    %376 = vmatprep.subr.bf16.mxu0 0
    %377 = vmatpush1.bf16.msra.mxu0 %v348
    %378 = vmatprep.subr.bf16.mxu0 0
    %379 = vmatpush1.bf16.msra.mxu0 %v347
    %380 = vmatprep.subr.bf16.mxu0 0
    %381 = vmatpush2.bf16.msra.mxu0 0
    %382 = vmatprep.subr.bf16.mxu0 0
    %383 = vmatpush2.bf16.msra.mxu0 0
    %384 = vmatprep.subr.bf16.mxu0 0
    %385 = vmatpush2.bf16.msra.mxu0 0
    %386 = vmatprep.subr.bf16.mxu0 0
    %387 = vmatpush2.bf16.msra.mxu0 0
    %388 = vmatprep.subr.bf16.mxu0 0
    %389 = vmatpush2.bf16.msra.mxu0 0
    %390 = vmatprep.subr.bf16.mxu0 0
    %391 = vmatpush2.bf16.msra.mxu0 0
    %392 = vmatprep.subr.bf16.mxu0 0
    %393 = vmatpush2.bf16.msra.mxu0 0
    %394 = vmatprep.subr.bf16.mxu0 0
    %395 = vmatpush2.bf16.msra.mxu0 0
    %396 = vmatprep.mubr.bf16.mxu0 0
    %397 = vmatmul.mubr.bf16.gmra.mxu0 %v353
    %v398 = vpop.f32.mrf.mxu0
    %v399 = vadd.f32 %v338, %v398
    %v400 = vpop.f32.mrf.mxu0
    %v401 = vpop.f32.mrf.mxu0
    %v402 = vadd.f32 %v338, %v401
    %v403 = vpop.f32.mrf.mxu0
    %404 = vmatprep.mubr.bf16.mxu0 0
    %405 = vmatmul.mubr.bf16.gmra.mxu0 %v356
    %v406 = vpop.f32.mrf.mxu0
    %v407 = vadd.f32 %v338, %v406
    %v408 = vpop.f32.mrf.mxu0
    %v409 = vpop.f32.mrf.mxu0
    %v410 = vadd.f32 %v338, %v409
    %v411 = vpop.f32.mrf.mxu0
    %412 = vmatprep.mubr.bf16.mxu0 0
    %413 = vmatmul.mubr.bf16.gmra.mxu0 %v359
    %v414 = vpop.f32.mrf.mxu0
    %v415 = vadd.f32 %v338, %v414
    %v416 = vpop.f32.mrf.mxu0
    %v417 = vpop.f32.mrf.mxu0
    %v418 = vadd.f32 %v338, %v417
    %v419 = vpop.f32.mrf.mxu0
    %420 = vmatprep.mubr.bf16.mxu0 0
    %421 = vmatmul.mubr.bf16.gmra.mxu0 %v362
    %v422 = vpop.f32.mrf.mxu0
    %v423 = vadd.f32 %v338, %v422
    %v424 = vpop.f32.mrf.mxu0
    %v425 = vpop.f32.mrf.mxu0
    %v426 = vadd.f32 %v338, %v425
    %v427 = vpop.f32.mrf.mxu0
    %428 = vdwg.mxu0
    %v429 = vmax.f32 %v399, 0.0
    %v430 = vmax.f32 %v402, 0.0
    %v431 = vmax.f32 %v407, 0.0
    %v432 = vmax.f32 %v410, 0.0
    %v433 = vmax.f32 %v415, 0.0
    %v434 = vmax.f32 %v418, 0.0
    %v435 = vmax.f32 %v423, 0.0
    %v436 = vmax.f32 %v426, 0.0
    %v437 = vpack.c.bf16 %v430, %v429
    %v438 = vpack.c.bf16 %v432, %v431
    %v439 = vpack.c.bf16 %v434, %v433
    %v440 = vpack.c.bf16 %v436, %v435
    %v441 = vld [vmem:[%s1 + $0x1c] sm:$0xf]
    %v442 = vld [vmem:[%s1 + $0x20] sm:$0xf]
    %v443 = vld [vmem:[%s1 + $0x24] sm:$0xf]
    %v444 = vld [vmem:[%s1 + $0x28] sm:$0xf]
    %v445 = vld [vmem:[%s1 + $0x2c] sm:$0xf]
    %v446 = vld [vmem:[%s1 + $0x30] sm:$0xf]
    %v447 = vld [vmem:[%s1 + $0x34] sm:$0xf]
    %v448 = vld [vmem:[%s1 + $0x38] sm:$0xf]
    %v449 = vld [vmem:[#allocation2 + $0x3] sm:$0x1]
    %v450 = vlaneseq
    %v451 = vshrl.u32 %v450, 7
    %v452 = vsub.s32 0, %v451
    %v453 = vrot.slane %v449, %v452
    %v462 = vunpack.c.l.b16 %v441
    %v463 = vunpack.c.l.b16 %v442
    %v464 = vunpack.c.l.b16 %v443
    %v465 = vunpack.c.l.b16 %v444
    %v466 = vunpack.c.l.b16 %v445
    %v467 = vunpack.c.l.b16 %v446
    %v468 = vunpack.c.l.b16 %v447
    %v469 = vunpack.c.l.b16 %v448
    %v470 = vpack.c.b16 %v463, %v462
    %v471 = vpack.c.b16 %v465, %v464
    %v472 = vpack.c.b16 %v467, %v466
    %v473 = vpack.c.b16 %v469, %v468
    %vm478 = vcmask 523264
    %v480 = vsel %vm478, %v437, 0
    %v483 = vsel %vm478, %v438, 0
    %v486 = vsel %vm478, %v439, 0
    %v489 = vsel %vm478, %v440, 0
    %491 = vmatprep.subr.bf16.mxu0 0
    %492 = vmatpush1.bf16.msra.mxu0 0
    %493 = vmatprep.subr.bf16.mxu0 0
    %494 = vmatpush1.bf16.msra.mxu0 0
    %495 = vmatprep.subr.bf16.mxu0 0
    %496 = vmatpush1.bf16.msra.mxu0 0
    %497 = vmatprep.subr.bf16.mxu0 0
    %498 = vmatpush1.bf16.msra.mxu0 0
    %499 = vmatprep.subr.bf16.mxu0 0
    %500 = vmatpush1.bf16.msra.mxu0 %v473
    %501 = vmatprep.subr.bf16.mxu0 0
    %502 = vmatpush1.bf16.msra.mxu0 %v472
    %503 = vmatprep.subr.bf16.mxu0 0
    %504 = vmatpush1.bf16.msra.mxu0 %v471
    %505 = vmatprep.subr.bf16.mxu0 0
    %506 = vmatpush1.bf16.msra.mxu0 %v470
    %507 = vmatprep.subr.bf16.mxu0 0
    %508 = vmatpush2.bf16.msra.mxu0 0
    %509 = vmatprep.subr.bf16.mxu0 0
    %510 = vmatpush2.bf16.msra.mxu0 0
    %511 = vmatprep.subr.bf16.mxu0 0
    %512 = vmatpush2.bf16.msra.mxu0 0
    %513 = vmatprep.subr.bf16.mxu0 0
    %514 = vmatpush2.bf16.msra.mxu0 0
    %515 = vmatprep.subr.bf16.mxu0 0
    %516 = vmatpush2.bf16.msra.mxu0 0
    %517 = vmatprep.subr.bf16.mxu0 0
    %518 = vmatpush2.bf16.msra.mxu0 0
    %519 = vmatprep.subr.bf16.mxu0 0
    %520 = vmatpush2.bf16.msra.mxu0 0
    %521 = vmatprep.subr.bf16.mxu0 0
    %522 = vmatpush2.bf16.msra.mxu0 0
    %523 = vmatprep.mubr.bf16.mxu0 0
    %524 = vmatmul.mubr.bf16.gmra.mxu0 %v480
    %v525 = vpop.f32.mrf.mxu0
    %v526 = vadd.f32 %v453, %v525
    %v527 = vpop.f32.mrf.mxu0
    %v528 = vpop.f32.mrf.mxu0
    %v529 = vadd.f32 %v453, %v528
    %v530 = vpop.f32.mrf.mxu0
    %531 = vmatprep.mubr.bf16.mxu0 0
    %532 = vmatmul.mubr.bf16.gmra.mxu0 %v483
    %v533 = vpop.f32.mrf.mxu0
    %v534 = vadd.f32 %v453, %v533
    %v535 = vpop.f32.mrf.mxu0
    %v536 = vpop.f32.mrf.mxu0
    %v537 = vadd.f32 %v453, %v536
    %v538 = vpop.f32.mrf.mxu0
    %539 = vmatprep.mubr.bf16.mxu0 0
    %540 = vmatmul.mubr.bf16.gmra.mxu0 %v486
    %v541 = vpop.f32.mrf.mxu0
    %v542 = vadd.f32 %v453, %v541
    %v543 = vpop.f32.mrf.mxu0
    %v544 = vpop.f32.mrf.mxu0
    %v545 = vadd.f32 %v453, %v544
    %v546 = vpop.f32.mrf.mxu0
    %547 = vmatprep.mubr.bf16.mxu0 0
    %548 = vmatmul.mubr.bf16.gmra.mxu0 %v489
    %v549 = vpop.f32.mrf.mxu0
    %v550 = vadd.f32 %v453, %v549
    %v551 = vpop.f32.mrf.mxu0
    %v552 = vpop.f32.mrf.mxu0
    %v553 = vadd.f32 %v453, %v552
    %v554 = vpop.f32.mrf.mxu0
    %555 = vdwg.mxu0
    %556 = vst.msk [vmem:[%s3] sm:$0xff] %vm40, %v526
    %557 = vst.msk [vmem:[%s3 + $0x8] sm:$0xff] %vm40, %v529
    %558 = vst.msk [vmem:[%s3 + $0x10] sm:$0xff] %vm40, %v534
    %559 = vst.msk [vmem:[%s3 + $0x18] sm:$0xff] %vm40, %v537
    %560 = vst.msk [vmem:[%s3 + $0x20] sm:$0xff] %vm40, %v542
    %561 = vst.msk [vmem:[%s3 + $0x28] sm:$0xff] %vm40, %v545
    %562 = vst.msk [vmem:[%s3 + $0x30] sm:$0xff] %vm40, %v550
    %563 = vst.msk [vmem:[%s3 + $0x38] sm:$0xff] %vm40, %v553
    // Predicated region
    $region18: #{tpu_custom_call.1} parent=1 // pred_check
      _
    $region19: #{tpu_custom_call.1} parent=1 // pred_check_branch
      %565 = sbr.rel (0) target = $region21
    $region20: #{tpu_custom_call.1} parent=1 // pred_region
      _
    $region21: #{tpu_custom_call.1} parent=1 // pred_fallthru
      _
    // Predicated region
    $region22: #{tpu_custom_call.1} parent=1 // pred_check
      _
    $region23: #{tpu_custom_call.1} parent=1 // pred_check_branch
      %567 = sbr.rel (0) target = $region25
    $region24: #{tpu_custom_call.1} parent=1 // pred_region
      _
    $region25: #{tpu_custom_call.1} parent=1 // pred_fallthru
      _
    %568 = vsyncpa [#allocation3], 1

</llo_original>
